<compile_context>
chip_gen: v5e
topology: v5e:2x2
jax: 0.10.0
libtpu: 0.0.40
codegen_flags: <defaults>
</compile_context>

<pallas_src>
import functools
import math

import jax
import jax.numpy as jnp
from jax import lax
from jax.experimental import pallas as pl
from jax.experimental.pallas import tpu as pltpu


_VMEM_LIMIT = 32 * 1024 * 1024  # scoped VMEM limit, safe on v5e/v6e/v7x


def _tile(dim, prefs):
    """Pick the largest preferred tile that divides `dim`; otherwise use the full dim."""
    for p in prefs:
        if dim >= p and dim % p == 0:
            return p
    return dim


# ----------------------------- tiled linear (x @ W + b, optional ReLU) -----------------------------

def linear_kernel(x_ref, w_ref, b_ref, o_ref, acc_ref, *, activation):
    k = pl.program_id(2)

    @pl.when(k == 0)
    def _():
        acc_ref[...] = jnp.zeros_like(acc_ref)

    acc_ref[...] += jnp.dot(x_ref[...], w_ref[...], preferred_element_type=jnp.float32)

    @pl.when(k == pl.num_programs(2) - 1)
    def _():
        y = acc_ref[...] + b_ref[...].astype(jnp.float32)
        if activation == "relu":
            y = jnp.maximum(y, 0.0)
        o_ref[...] = y.astype(o_ref.dtype)


def pallas_linear(x2d, w, b, activation="none"):
    """y = x2d @ w + b ; w is stored as (Din, Dout) so no transpose is needed per call."""
    M, K = x2d.shape
    K2, N = w.shape
    assert K == K2
    tm = _tile(M, (256, 128))
    tn = _tile(N, (256, 128))
    tk = _tile(K, (512, 256, 128))
    grid = (M // tm, N // tn, K // tk)
    return pl.pallas_call(
        functools.partial(linear_kernel, activation=activation),
        out_shape=jax.ShapeDtypeStruct((M, N), x2d.dtype),
        grid_spec=pltpu.PrefetchScalarGridSpec(
            num_scalar_prefetch=0,
            grid=grid,
            in_specs=[
                pl.BlockSpec((tm, tk), lambda i, j, k: (i, k)),
                pl.BlockSpec((tk, tn), lambda i, j, k: (k, j)),
                pl.BlockSpec((1, tn), lambda i, j, k: (0, j)),
            ],
            out_specs=pl.BlockSpec((tm, tn), lambda i, j, k: (i, j)),
            scratch_shapes=[pltpu.VMEM((tm, tn), jnp.float32)],
        ),
        compiler_params=pltpu.CompilerParams(
            dimension_semantics=("parallel", "parallel", "arbitrary"),
            vmem_limit_bytes=_VMEM_LIMIT,
        ),
    )(x2d, w, b.reshape(1, N))


# ----------------------------- LayerNorm (PyTorch semantics: unbiased std, eps added to std) -------

def layernorm_kernel(x_ref, a_ref, b_ref, o_ref, *, eps):
    x = x_ref[...].astype(jnp.float32)
    d = x.shape[-1]
    mean = jnp.mean(x, axis=-1, keepdims=True)
    diff = x - mean
    # torch.Tensor.std uses the unbiased estimator (divide by d - 1)
    var = jnp.sum(diff * diff, axis=-1, keepdims=True) / jnp.float32(d - 1)
    std = jnp.sqrt(var)
    y = a_ref[...].astype(jnp.float32) * diff / (std + jnp.float32(eps)) + b_ref[...].astype(jnp.float32)
    o_ref[...] = y.astype(o_ref.dtype)


def pallas_layernorm(x2d, a, b, eps=1e-6):
    M, D = x2d.shape
    tm = _tile(M, (512, 256, 128))
    return pl.pallas_call(
        functools.partial(layernorm_kernel, eps=eps),
        out_shape=jax.ShapeDtypeStruct((M, D), x2d.dtype),
        grid=(M // tm,),
        in_specs=[
            pl.BlockSpec((tm, D), lambda i: (i, 0)),
            pl.BlockSpec((1, D), lambda i: (0, 0)),
            pl.BlockSpec((1, D), lambda i: (0, 0)),
        ],
        out_specs=pl.BlockSpec((tm, D), lambda i: (i, 0)),
        compiler_params=pltpu.CompilerParams(
            dimension_semantics=("parallel",),
            vmem_limit_bytes=_VMEM_LIMIT,
        ),
    )(x2d, a.reshape(1, D), b.reshape(1, D))


# ----------------------------- scaled dot-product attention (fused QKV in, (B,S,D) out) ------------

def attention_kernel(qkv_ref, mask_ref, o_ref, *, num_heads, head_dim, model_dim):
    qkv = qkv_ref[0]          # (S, 3*D): [q | k | v] on the lane axis
    mask = mask_ref[0]        # (S, S): 1 = attend, 0 = masked
    inv_sqrt_dk = jnp.float32(1.0 / math.sqrt(head_dim))

    for h in range(num_heads):  # static unroll over heads; slices are static
        q = qkv[:, h * head_dim:(h + 1) * head_dim].astype(jnp.float32)
        k = qkv[:, model_dim + h * head_dim: model_dim + (h + 1) * head_dim].astype(jnp.float32)
        v = qkv[:, 2 * model_dim + h * head_dim: 2 * model_dim + (h + 1) * head_dim]

        # scores = q @ k^T / sqrt(d_k)   (contract over head_dim without materializing k^T)
        s = lax.dot_general(q, k, (((1,), (1,)), ((), ())),
                            preferred_element_type=jnp.float32) * inv_sqrt_dk
        s = jnp.where(mask == 0, jnp.float32(-1.0e9), s)      # masked_fill(mask == 0, -1e9)

        # numerically-stable softmax; reciprocal on the EUP slot
        m = jnp.max(s, axis=-1, keepdims=True)
        p = jnp.exp(s - m)
        denom = jnp.sum(p, axis=-1, keepdims=True)
        p = p * pl.reciprocal(denom, approx=True)

        out_h = jnp.dot(p.astype(v.dtype), v, preferred_element_type=jnp.float32)
        # write directly into the (B, S, D) concat-of-heads slab (no XLA transpose afterwards)
        o_ref[0, :, h * head_dim:(h + 1) * head_dim] = out_h.astype(o_ref.dtype)


def pallas_attention(qkv, mask3, num_heads):
    B, S, threeD = qkv.shape
    D = threeD // 3
    head_dim = D // num_heads
    return pl.pallas_call(
        functools.partial(attention_kernel, num_heads=num_heads,
                          head_dim=head_dim, model_dim=D),
        out_shape=jax.ShapeDtypeStruct((B, S, D), qkv.dtype),
        grid=(B,),
        in_specs=[
            pl.BlockSpec((1, S, threeD), lambda b: (b, 0, 0)),
            pl.BlockSpec((1, S, S), lambda b: (b, 0, 0)),
        ],
        out_specs=pl.BlockSpec((1, S, D), lambda b: (b, 0, 0)),
        compiler_params=pltpu.CompilerParams(
            dimension_semantics=("parallel",),
            vmem_limit_bytes=_VMEM_LIMIT,
        ),
    )(qkv, mask3)


# ----------------------------- embedding gather (ids in SMEM via scalar prefetch) ------------------

def embedding_kernel(ids_ref, table_ref, o_ref, *, scale):
    ntok = o_ref.shape[0]

    def body(i, carry):
        tok = ids_ref[i]
        o_ref[pl.ds(i, 1), :] = table_ref[pl.ds(tok, 1), :] * jnp.float32(scale)
        return carry

    lax.fori_loop(0, ntok, body, 0, unroll=True)


def pallas_embedding(ids, table):
    """Embeddings.forward: lut(ids) * sqrt(num_features)."""
    B, S = ids.shape
    V, D = table.shape
    ntok = B * S
    ids_flat = ids.reshape(ntok).astype(jnp.int32)
    out = pl.pallas_call(
        functools.partial(embedding_kernel, scale=math.sqrt(D)),
        out_shape=jax.ShapeDtypeStruct((ntok, D), table.dtype),
        grid_spec=pltpu.PrefetchScalarGridSpec(
            num_scalar_prefetch=1,
            grid=(1,),
            in_specs=[pl.BlockSpec((V, D), lambda i, ids: (0, 0))],
            out_specs=pl.BlockSpec((ntok, D), lambda i, ids: (0, 0)),
        ),
        compiler_params=pltpu.CompilerParams(
            dimension_semantics=("arbitrary",),
            vmem_limit_bytes=_VMEM_LIMIT,
        ),
    )(ids_flat, table)
    return out.reshape(B, S, D)


# ----------------------------- parameters & full forward -------------------------------------------

def init_params(key, vocab_size, model_dim, num_heads, d_hidden, num_layers):
    keys = iter(jax.random.split(key, 64))

    def linear_init(k, din, dout):
        kw, kb = jax.random.split(k)
        bound = 1.0 / math.sqrt(din)
        w = jax.random.uniform(kw, (din, dout), jnp.float32, -bound, bound)  # stored (Din, Dout)
        b = jax.random.uniform(kb, (dout,), jnp.float32, -bound, bound)
        return w, b

    params = {
        "embedding": jax.random.normal(next(keys), (vocab_size, model_dim), jnp.float32),
        "layers": [],
        "final_ln_a": jnp.ones((model_dim,), jnp.float32),
        "final_ln_b": jnp.zeros((model_dim,), jnp.float32),
    }
    for _ in range(num_layers):
        w_qkv, b_qkv = linear_init(next(keys), model_dim, 3 * model_dim)   # fused q|k|v projection
        w_o, b_o = linear_init(next(keys), model_dim, model_dim)
        w_1, b_1 = linear_init(next(keys), model_dim, d_hidden)
        w_2, b_2 = linear_init(next(keys), d_hidden, model_dim)
        params["layers"].append({
            "w_qkv": w_qkv, "b_qkv": b_qkv, "w_o": w_o, "b_o": b_o,
            "w_1": w_1, "b_1": b_1, "w_2": w_2, "b_2": b_2,
            "ln1_a": jnp.ones((model_dim,), jnp.float32), "ln1_b": jnp.zeros((model_dim,), jnp.float32),
            "ln2_a": jnp.ones((model_dim,), jnp.float32), "ln2_b": jnp.zeros((model_dim,), jnp.float32),
        })
    return params


def encoder_model_forward(params, num_heads, input_ids, input_mask):
    """EncoderModel.forward (eval mode: all dropouts are identity)."""
    B, S = input_ids.shape
    D = params["embedding"].shape[1]
    mask3 = jnp.broadcast_to(input_mask.astype(jnp.float32).reshape(B, -1, S), (B, S, S))

    x = pallas_embedding(input_ids, params["embedding"])      # (B, S, D)
    x2d = x.reshape(B * S, D)

    for lp in params["layers"]:
        # --- self-attention sublayer: x + attn(LN(x)) ---
        h = pallas_layernorm(x2d, lp["ln1_a"], lp["ln1_b"])
        qkv = pallas_linear(h, lp["w_qkv"], lp["b_qkv"]).reshape(B, S, 3 * D)
        attn = pallas_attention(qkv, mask3, num_heads).reshape(B * S, D)
        attn_out = pallas_linear(attn, lp["w_o"], lp["b_o"])
        x2d = x2d + attn_out                                   # residual (dropout = identity)

        # --- feed-forward sublayer: x + FFN(LN(x)) ---
        h2 = pallas_layernorm(x2d, lp["ln2_a"], lp["ln2_b"])
        ff = pallas_linear(h2, lp["w_1"], lp["b_1"], activation="relu")
        ff = pallas_linear(ff, lp["w_2"], lp["b_2"])
        x2d = x2d + ff                                          # residual (dropout = identity)

    out2d = pallas_layernorm(x2d, params["final_ln_a"], params["final_ln_b"])
    return out2d.reshape(B, S, D)


# ----------------------------- pure-JAX reference (faithful port of the PyTorch module) ------------

def ref_layernorm(x, a, b, eps=1e-6):
    mean = jnp.mean(x, axis=-1, keepdims=True)
    std = jnp.std(x, axis=-1, keepdims=True, ddof=1)
    return a * (x - mean) / (std + eps) + b


def ref_forward(params, num_heads, input_ids, input_mask):
    emb = params["embedding"]
    D = emb.shape[1]
    B, S = input_ids.shape
    hd = D // num_heads
    x = emb[input_ids] * math.sqrt(D)
    mask4 = jnp.broadcast_to(input_mask.astype(jnp.float32).reshape(B, 1, -1, S), (B, 1, S, S))

    def heads(t):
        return t.reshape(B, S, num_heads, hd).transpose(0, 2, 1, 3)

    for lp in params["layers"]:
        h = ref_layernorm(x, lp["ln1_a"], lp["ln1_b"])
        qkv = h @ lp["w_qkv"] + lp["b_qkv"]
        q, k, v = jnp.split(qkv, 3, axis=-1)
        qh, kh, vh = heads(q), heads(k), heads(v)
        scores = jnp.einsum("bhqd,bhkd->bhqk", qh, kh) / math.sqrt(hd)
        scores = jnp.where(mask4 == 0, -1.0e9, scores)
        p = jax.nn.softmax(scores, axis=-1)
        a = jnp.einsum("bhqk,bhkd->bhqd", p, vh).transpose(0, 2, 1, 3).reshape(B, S, D)
        x = x + (a @ lp["w_o"] + lp["b_o"])
        h2 = ref_layernorm(x, lp["ln2_a"], lp["ln2_b"])
        ff = jnp.maximum(h2 @ lp["w_1"] + lp["b_1"], 0.0) @ lp["w_2"] + lp["b_2"]
        x = x + ff
    return ref_layernorm(x, params["final_ln_a"], params["final_ln_b"])


# --------------------------------- main --------------------------------------------------------------

if __name__ == "__main__":
    B, S, D, H = 2, 8, 32, 4        # batch=2, seq=8, model_dim=32, heads=4 (head_dim=8)
    VOCAB, D_HIDDEN, NUM_LAYERS = 64, 64, 2

    root = jax.random.PRNGKey(0)
    k_ids, k_params = jax.random.split(root)

    input_ids = jax.random.randint(k_ids, (B, S), 0, VOCAB, dtype=jnp.int32)
    # causal mask (1 = attend, 0 = masked), broadcast over heads like mask.unsqueeze(1)
    input_mask = jnp.broadcast_to(jnp.tril(jnp.ones((S, S), jnp.float32)), (B, S, S))

    params = init_params(k_params, VOCAB, D, H, D_HIDDEN, NUM_LAYERS)

    out = encoder_model_forward(params, H, input_ids, input_mask)
    jax.block_until_ready(out)

    ref = ref_forward(params, H, input_ids, input_mask)
    assert out.shape == (B, S, D)
    max_err = jnp.max(jnp.abs(out - ref))
    assert jnp.allclose(out, ref, atol=3e-3, rtol=3e-3), f"mismatch vs reference, max abs err {max_err}"

    print("KERNEL_OK")
</pallas_src>

<mosaic_0001>
module attributes {stable_mosaic.version = 11 : i64} {
  func.func @embedding_kernel(%arg0: i32, %arg1: memref<16xi32, #tpu.memory_space<smem>>, %arg2: memref<64x32xf32, #tpu.memory_space<vmem>>, %arg3: memref<16x32xf32, #tpu.memory_space<vmem>>) attributes {dimension_semantics = [#tpu.dimension_semantics<arbitrary>], iteration_bounds = array<i64: 1>, scalar_prefetch = 1 : i64, scratch_operands = 0 : i64, tpu.core_type = #tpu.core_type<tc>, window_params = [{pipeline_mode = #tpu.pipeline_mode<synchronous>, transform_indices = @transform_0, window_bounds = array<i64: 64, 32>}, {pipeline_mode = #tpu.pipeline_mode<synchronous>, transform_indices = @transform_1, window_bounds = array<i64: 16, 32>}]} {
    %c0_i32 = arith.constant 0 : i32
    %0 = arith.index_cast %c0_i32 : i32 to index
    %1 = memref.load %arg1[%0] : memref<16xi32, #tpu.memory_space<smem>>
    %2 = arith.index_cast %1 : i32 to index
    %c0 = arith.constant 0 : index
    %3 = vector.load %arg2[%2, %c0] : memref<64x32xf32, #tpu.memory_space<vmem>>, vector<1x32xf32>
    %cst = arith.constant 5.65685415 : f32
    %4 = vector.broadcast %cst : f32 to vector<1x32xf32>
    %5 = arith.mulf %3, %4 : vector<1x32xf32>
    %6 = arith.index_cast %c0_i32 : i32 to index
    %c0_0 = arith.constant 0 : index
    %7 = vector.load %arg3[%6, %c0_0] : memref<16x32xf32, #tpu.memory_space<vmem>>, vector<1x32xf32>
    tpu.vector_store %arg3[%6, %c0_0], %5 {strides = array<i32>} : memref<16x32xf32, #tpu.memory_space<vmem>>, vector<1x32xf32>,
    %c1_i32 = arith.constant 1 : i32
    %8 = arith.index_cast %c1_i32 : i32 to index
    %9 = memref.load %arg1[%8] : memref<16xi32, #tpu.memory_space<smem>>
    %10 = arith.index_cast %9 : i32 to index
    %c0_1 = arith.constant 0 : index
    %11 = vector.load %arg2[%10, %c0_1] : memref<64x32xf32, #tpu.memory_space<vmem>>, vector<1x32xf32>
    %cst_2 = arith.constant 5.65685415 : f32
    %12 = vector.broadcast %cst_2 : f32 to vector<1x32xf32>
    %13 = arith.mulf %11, %12 : vector<1x32xf32>
    %14 = arith.index_cast %c1_i32 : i32 to index
    %c0_3 = arith.constant 0 : index
    %15 = vector.load %arg3[%14, %c0_3] : memref<16x32xf32, #tpu.memory_space<vmem>>, vector<1x32xf32>
    tpu.vector_store %arg3[%14, %c0_3], %13 {strides = array<i32>} : memref<16x32xf32, #tpu.memory_space<vmem>>, vector<1x32xf32>,
    %c2_i32 = arith.constant 2 : i32
    %16 = arith.index_cast %c2_i32 : i32 to index
    %17 = memref.load %arg1[%16] : memref<16xi32, #tpu.memory_space<smem>>
    %18 = arith.index_cast %17 : i32 to index
    %c0_4 = arith.constant 0 : index
    %19 = vector.load %arg2[%18, %c0_4] : memref<64x32xf32, #tpu.memory_space<vmem>>, vector<1x32xf32>
    %cst_5 = arith.constant 5.65685415 : f32
    %20 = vector.broadcast %cst_5 : f32 to vector<1x32xf32>
    %21 = arith.mulf %19, %20 : vector<1x32xf32>
    %22 = arith.index_cast %c2_i32 : i32 to index
    %c0_6 = arith.constant 0 : index
    %23 = vector.load %arg3[%22, %c0_6] : memref<16x32xf32, #tpu.memory_space<vmem>>, vector<1x32xf32>
    tpu.vector_store %arg3[%22, %c0_6], %21 {strides = array<i32>} : memref<16x32xf32, #tpu.memory_space<vmem>>, vector<1x32xf32>,
    %c3_i32 = arith.constant 3 : i32
    %24 = arith.index_cast %c3_i32 : i32 to index
    %25 = memref.load %arg1[%24] : memref<16xi32, #tpu.memory_space<smem>>
    %26 = arith.index_cast %25 : i32 to index
    %c0_7 = arith.constant 0 : index
    %27 = vector.load %arg2[%26, %c0_7] : memref<64x32xf32, #tpu.memory_space<vmem>>, vector<1x32xf32>
    %cst_8 = arith.constant 5.65685415 : f32
    %28 = vector.broadcast %cst_8 : f32 to vector<1x32xf32>
    %29 = arith.mulf %27, %28 : vector<1x32xf32>
    %30 = arith.index_cast %c3_i32 : i32 to index
    %c0_9 = arith.constant 0 : index
    %31 = vector.load %arg3[%30, %c0_9] : memref<16x32xf32, #tpu.memory_space<vmem>>, vector<1x32xf32>
    tpu.vector_store %arg3[%30, %c0_9], %29 {strides = array<i32>} : memref<16x32xf32, #tpu.memory_space<vmem>>, vector<1x32xf32>,
    %c4_i32 = arith.constant 4 : i32
    %32 = arith.index_cast %c4_i32 : i32 to index
    %33 = memref.load %arg1[%32] : memref<16xi32, #tpu.memory_space<smem>>
    %34 = arith.index_cast %33 : i32 to index
    %c0_10 = arith.constant 0 : index
    %35 = vector.load %arg2[%34, %c0_10] : memref<64x32xf32, #tpu.memory_space<vmem>>, vector<1x32xf32>
    %cst_11 = arith.constant 5.65685415 : f32
    %36 = vector.broadcast %cst_11 : f32 to vector<1x32xf32>
    %37 = arith.mulf %35, %36 : vector<1x32xf32>
    %38 = arith.index_cast %c4_i32 : i32 to index
    %c0_12 = arith.constant 0 : index
    %39 = vector.load %arg3[%38, %c0_12] : memref<16x32xf32, #tpu.memory_space<vmem>>, vector<1x32xf32>
    tpu.vector_store %arg3[%38, %c0_12], %37 {strides = array<i32>} : memref<16x32xf32, #tpu.memory_space<vmem>>, vector<1x32xf32>,
    %c5_i32 = arith.constant 5 : i32
    %40 = arith.index_cast %c5_i32 : i32 to index
    %41 = memref.load %arg1[%40] : memref<16xi32, #tpu.memory_space<smem>>
    %42 = arith.index_cast %41 : i32 to index
    %c0_13 = arith.constant 0 : index
    %43 = vector.load %arg2[%42, %c0_13] : memref<64x32xf32, #tpu.memory_space<vmem>>, vector<1x32xf32>
    %cst_14 = arith.constant 5.65685415 : f32
    %44 = vector.broadcast %cst_14 : f32 to vector<1x32xf32>
    %45 = arith.mulf %43, %44 : vector<1x32xf32>
    %46 = arith.index_cast %c5_i32 : i32 to index
    %c0_15 = arith.constant 0 : index
    %47 = vector.load %arg3[%46, %c0_15] : memref<16x32xf32, #tpu.memory_space<vmem>>, vector<1x32xf32>
    tpu.vector_store %arg3[%46, %c0_15], %45 {strides = array<i32>} : memref<16x32xf32, #tpu.memory_space<vmem>>, vector<1x32xf32>,
    %c6_i32 = arith.constant 6 : i32
    %48 = arith.index_cast %c6_i32 : i32 to index
    %49 = memref.load %arg1[%48] : memref<16xi32, #tpu.memory_space<smem>>
    %50 = arith.index_cast %49 : i32 to index
    %c0_16 = arith.constant 0 : index
    %51 = vector.load %arg2[%50, %c0_16] : memref<64x32xf32, #tpu.memory_space<vmem>>, vector<1x32xf32>
    %cst_17 = arith.constant 5.65685415 : f32
    %52 = vector.broadcast %cst_17 : f32 to vector<1x32xf32>
    %53 = arith.mulf %51, %52 : vector<1x32xf32>
    %54 = arith.index_cast %c6_i32 : i32 to index
    %c0_18 = arith.constant 0 : index
    %55 = vector.load %arg3[%54, %c0_18] : memref<16x32xf32, #tpu.memory_space<vmem>>, vector<1x32xf32>
    tpu.vector_store %arg3[%54, %c0_18], %53 {strides = array<i32>} : memref<16x32xf32, #tpu.memory_space<vmem>>, vector<1x32xf32>,
    %c7_i32 = arith.constant 7 : i32
    %56 = arith.index_cast %c7_i32 : i32 to index
    %57 = memref.load %arg1[%56] : memref<16xi32, #tpu.memory_space<smem>>
    %58 = arith.index_cast %57 : i32 to index
    %c0_19 = arith.constant 0 : index
    %59 = vector.load %arg2[%58, %c0_19] : memref<64x32xf32, #tpu.memory_space<vmem>>, vector<1x32xf32>
    %cst_20 = arith.constant 5.65685415 : f32
    %60 = vector.broadcast %cst_20 : f32 to vector<1x32xf32>
    %61 = arith.mulf %59, %60 : vector<1x32xf32>
    %62 = arith.index_cast %c7_i32 : i32 to index
    %c0_21 = arith.constant 0 : index
    %63 = vector.load %arg3[%62, %c0_21] : memref<16x32xf32, #tpu.memory_space<vmem>>, vector<1x32xf32>
    tpu.vector_store %arg3[%62, %c0_21], %61 {strides = array<i32>} : memref<16x32xf32, #tpu.memory_space<vmem>>, vector<1x32xf32>,
    %c8_i32 = arith.constant 8 : i32
    %64 = arith.index_cast %c8_i32 : i32 to index
    %65 = memref.load %arg1[%64] : memref<16xi32, #tpu.memory_space<smem>>
    %66 = arith.index_cast %65 : i32 to index
    %c0_22 = arith.constant 0 : index
    %67 = vector.load %arg2[%66, %c0_22] : memref<64x32xf32, #tpu.memory_space<vmem>>, vector<1x32xf32>
    %cst_23 = arith.constant 5.65685415 : f32
    %68 = vector.broadcast %cst_23 : f32 to vector<1x32xf32>
    %69 = arith.mulf %67, %68 : vector<1x32xf32>
    %70 = arith.index_cast %c8_i32 : i32 to index
    %c0_24 = arith.constant 0 : index
    %71 = vector.load %arg3[%70, %c0_24] : memref<16x32xf32, #tpu.memory_space<vmem>>, vector<1x32xf32>
    tpu.vector_store %arg3[%70, %c0_24], %69 {strides = array<i32>} : memref<16x32xf32, #tpu.memory_space<vmem>>, vector<1x32xf32>,
    %c9_i32 = arith.constant 9 : i32
    %72 = arith.index_cast %c9_i32 : i32 to index
    %73 = memref.load %arg1[%72] : memref<16xi32, #tpu.memory_space<smem>>
    %74 = arith.index_cast %73 : i32 to index
    %c0_25 = arith.constant 0 : index
    %75 = vector.load %arg2[%74, %c0_25] : memref<64x32xf32, #tpu.memory_space<vmem>>, vector<1x32xf32>
    %cst_26 = arith.constant 5.65685415 : f32
    %76 = vector.broadcast %cst_26 : f32 to vector<1x32xf32>
    %77 = arith.mulf %75, %76 : vector<1x32xf32>
    %78 = arith.index_cast %c9_i32 : i32 to index
    %c0_27 = arith.constant 0 : index
    %79 = vector.load %arg3[%78, %c0_27] : memref<16x32xf32, #tpu.memory_space<vmem>>, vector<1x32xf32>
    tpu.vector_store %arg3[%78, %c0_27], %77 {strides = array<i32>} : memref<16x32xf32, #tpu.memory_space<vmem>>, vector<1x32xf32>,
    %c10_i32 = arith.constant 10 : i32
    %80 = arith.index_cast %c10_i32 : i32 to index
    %81 = memref.load %arg1[%80] : memref<16xi32, #tpu.memory_space<smem>>
    %82 = arith.index_cast %81 : i32 to index
    %c0_28 = arith.constant 0 : index
    %83 = vector.load %arg2[%82, %c0_28] : memref<64x32xf32, #tpu.memory_space<vmem>>, vector<1x32xf32>
    %cst_29 = arith.constant 5.65685415 : f32
    %84 = vector.broadcast %cst_29 : f32 to vector<1x32xf32>
    %85 = arith.mulf %83, %84 : vector<1x32xf32>
    %86 = arith.index_cast %c10_i32 : i32 to index
    %c0_30 = arith.constant 0 : index
    %87 = vector.load %arg3[%86, %c0_30] : memref<16x32xf32, #tpu.memory_space<vmem>>, vector<1x32xf32>
    tpu.vector_store %arg3[%86, %c0_30], %85 {strides = array<i32>} : memref<16x32xf32, #tpu.memory_space<vmem>>, vector<1x32xf32>,
    %c11_i32 = arith.constant 11 : i32
    %88 = arith.index_cast %c11_i32 : i32 to index
    %89 = memref.load %arg1[%88] : memref<16xi32, #tpu.memory_space<smem>>
    %90 = arith.index_cast %89 : i32 to index
    %c0_31 = arith.constant 0 : index
    %91 = vector.load %arg2[%90, %c0_31] : memref<64x32xf32, #tpu.memory_space<vmem>>, vector<1x32xf32>
    %cst_32 = arith.constant 5.65685415 : f32
    %92 = vector.broadcast %cst_32 : f32 to vector<1x32xf32>
    %93 = arith.mulf %91, %92 : vector<1x32xf32>
    %94 = arith.index_cast %c11_i32 : i32 to index
    %c0_33 = arith.constant 0 : index
    %95 = vector.load %arg3[%94, %c0_33] : memref<16x32xf32, #tpu.memory_space<vmem>>, vector<1x32xf32>
    tpu.vector_store %arg3[%94, %c0_33], %93 {strides = array<i32>} : memref<16x32xf32, #tpu.memory_space<vmem>>, vector<1x32xf32>,
    %c12_i32 = arith.constant 12 : i32
    %96 = arith.index_cast %c12_i32 : i32 to index
    %97 = memref.load %arg1[%96] : memref<16xi32, #tpu.memory_space<smem>>
    %98 = arith.index_cast %97 : i32 to index
    %c0_34 = arith.constant 0 : index
    %99 = vector.load %arg2[%98, %c0_34] : memref<64x32xf32, #tpu.memory_space<vmem>>, vector<1x32xf32>
    %cst_35 = arith.constant 5.65685415 : f32
    %100 = vector.broadcast %cst_35 : f32 to vector<1x32xf32>
    %101 = arith.mulf %99, %100 : vector<1x32xf32>
    %102 = arith.index_cast %c12_i32 : i32 to index
    %c0_36 = arith.constant 0 : index
    %103 = vector.load %arg3[%102, %c0_36] : memref<16x32xf32, #tpu.memory_space<vmem>>, vector<1x32xf32>
    tpu.vector_store %arg3[%102, %c0_36], %101 {strides = array<i32>} : memref<16x32xf32, #tpu.memory_space<vmem>>, vector<1x32xf32>,
    %c13_i32 = arith.constant 13 : i32
    %104 = arith.index_cast %c13_i32 : i32 to index
    %105 = memref.load %arg1[%104] : memref<16xi32, #tpu.memory_space<smem>>
    %106 = arith.index_cast %105 : i32 to index
    %c0_37 = arith.constant 0 : index
    %107 = vector.load %arg2[%106, %c0_37] : memref<64x32xf32, #tpu.memory_space<vmem>>, vector<1x32xf32>
    %cst_38 = arith.constant 5.65685415 : f32
    %108 = vector.broadcast %cst_38 : f32 to vector<1x32xf32>
    %109 = arith.mulf %107, %108 : vector<1x32xf32>
    %110 = arith.index_cast %c13_i32 : i32 to index
    %c0_39 = arith.constant 0 : index
    %111 = vector.load %arg3[%110, %c0_39] : memref<16x32xf32, #tpu.memory_space<vmem>>, vector<1x32xf32>
    tpu.vector_store %arg3[%110, %c0_39], %109 {strides = array<i32>} : memref<16x32xf32, #tpu.memory_space<vmem>>, vector<1x32xf32>,
    %c14_i32 = arith.constant 14 : i32
    %112 = arith.index_cast %c14_i32 : i32 to index
    %113 = memref.load %arg1[%112] : memref<16xi32, #tpu.memory_space<smem>>
    %114 = arith.index_cast %113 : i32 to index
    %c0_40 = arith.constant 0 : index
    %115 = vector.load %arg2[%114, %c0_40] : memref<64x32xf32, #tpu.memory_space<vmem>>, vector<1x32xf32>
    %cst_41 = arith.constant 5.65685415 : f32
    %116 = vector.broadcast %cst_41 : f32 to vector<1x32xf32>
    %117 = arith.mulf %115, %116 : vector<1x32xf32>
    %118 = arith.index_cast %c14_i32 : i32 to index
    %c0_42 = arith.constant 0 : index
    %119 = vector.load %arg3[%118, %c0_42] : memref<16x32xf32, #tpu.memory_space<vmem>>, vector<1x32xf32>
    tpu.vector_store %arg3[%118, %c0_42], %117 {strides = array<i32>} : memref<16x32xf32, #tpu.memory_space<vmem>>, vector<1x32xf32>,
    %c15_i32 = arith.constant 15 : i32
    %120 = arith.index_cast %c15_i32 : i32 to index
    %121 = memref.load %arg1[%120] : memref<16xi32, #tpu.memory_space<smem>>
    %122 = arith.index_cast %121 : i32 to index
    %c0_43 = arith.constant 0 : index
    %123 = vector.load %arg2[%122, %c0_43] : memref<64x32xf32, #tpu.memory_space<vmem>>, vector<1x32xf32>
    %cst_44 = arith.constant 5.65685415 : f32
    %124 = vector.broadcast %cst_44 : f32 to vector<1x32xf32>
    %125 = arith.mulf %123, %124 : vector<1x32xf32>
    %126 = arith.index_cast %c15_i32 : i32 to index
    %c0_45 = arith.constant 0 : index
    %127 = vector.load %arg3[%126, %c0_45] : memref<16x32xf32, #tpu.memory_space<vmem>>, vector<1x32xf32>
    tpu.vector_store %arg3[%126, %c0_45], %125 {strides = array<i32>} : memref<16x32xf32, #tpu.memory_space<vmem>>, vector<1x32xf32>,
    %c16_i32 = arith.constant 16 : i32
    return
  }
  func.func @transform_0(%arg0: i32, %arg1: memref<16xi32, #tpu.memory_space<smem>>) -> (i32, i32) {
    %c0_i32 = arith.constant 0 : i32
    %c0_i32_0 = arith.constant 0 : i32
    %c0_i32_1 = arith.constant 0 : i32
    return %c0_i32, %c0_i32_0 : i32, i32
  }
  func.func @transform_1(%arg0: i32, %arg1: memref<16xi32, #tpu.memory_space<smem>>) -> (i32, i32) {
    %c0_i32 = arith.constant 0 : i32
    %c0_i32_0 = arith.constant 0 : i32
    %c0_i32_1 = arith.constant 0 : i32
    return %c0_i32, %c0_i32_0 : i32, i32
  }
}

</mosaic_0001>

<llo_original>
// kernel: tpu_custom_call.1
$region0: #{tpu_custom_call.1}
  #allocation0 [shape = 'u32[]', space=smem, size = 0x4, offset = 0x4, fixed_abs, tag = 'smem constant byte address 0x4 - core index']
  #allocation1 [shape = 'u32[72,128]{1,0:T(1,128)}', space=vmem, size = 0x9000, scoped, tag = 'internal scratch']
  #allocation2 [shape = 's32[1]{0}', space=sflag, size = 0x4, scoped, tag = 'scoped memory for tpu_custom_call.1']
  #allocation3 [shape = 'u8[512]{0}', space=smem, size = 0x200, scoped, tag = 'prefetched SMEM operand 0']
  %s0 = inlined_call_operand.vmem [shape: s32[16], index: 0, kind: input, shape index: {}]
  %s1 = inlined_call_operand.vmem [shape: f32[64,32], index: 1, kind: input, shape index: {}]
  %s2 = inlined_call_operand.hbm [shape: f32[16,32], index: 2, kind: output, shape index: {}]
  %s3 = sld [smem:[#allocation0]]
  $region14: #{tpu_custom_call.1} parent=0
    _
  %s5 = ssub.s32 1, %s3
  %s6 = scalar_select 0, %s5, %s3
  %s8 = sshll.u32 %s0, 4
  %s9 = int_to_ptr.vmem [resolvable:$true] %s8
  %11 = dma.vmem_to_smem %s9, 16, [#allocation3], [#allocation2]
  %13 = dma.done [#allocation2], 16
  %14 = sfence
  $region1: #{tpu_custom_call.1} parent=0
    #allocation4 [shape = 'u8[8192]{0}', space=vmem, size = 0x2000, scoped, tag = 'output window, operand 0, single buffered']
    #allocation5 [shape = 's32[1]{0}', space=sflag, size = 0x4, scoped, tag = 'scoped memory for tpu_custom_call.1']
    %15 = vsyncpa [#allocation5], 0
    // Predicated region
    $region2: #{tpu_custom_call.1} parent=1 // pred_check
      _
    $region3: #{tpu_custom_call.1} parent=1 // pred_check_branch
      %17 = sbr.rel (0) target = $region5
    $region4: #{tpu_custom_call.1} parent=1 // pred_region
      _
    $region5: #{tpu_custom_call.1} parent=1 // pred_fallthru
      _
    %s18 = sld [smem:[#allocation3]]
    %s19 = scalar_lea.vmem %s1, %s18
    %v20 = vld [vmem:[%s19] sm:$0x1]
    %v21 = vmul.f32 %v20, 5.656854
    %vm22 = vcmask 253952
    %23 = vst.msk [vmem:[#allocation4] sm:$0x1] %vm22, %v21
    %s24 = sld [smem:[#allocation3 + $0x1]]
    %s25 = scalar_lea.vmem %s1, %s24
    %v26 = vld [vmem:[%s25] sm:$0x1]
    %v27 = vmul.f32 %v26, 5.656854
    %28 = vst.msk [vmem:[#allocation4 + $0x1] sm:$0x1] %vm22, %v27
    %s29 = sld [smem:[#allocation3 + $0x2]]
    %s30 = scalar_lea.vmem %s1, %s29
    %v31 = vld [vmem:[%s30] sm:$0x1]
    %v32 = vmul.f32 %v31, 5.656854
    %33 = vst.msk [vmem:[#allocation4 + $0x2] sm:$0x1] %vm22, %v32
    %s34 = sld [smem:[#allocation3 + $0x3]]
    %s35 = scalar_lea.vmem %s1, %s34
    %v36 = vld [vmem:[%s35] sm:$0x1]
    %v37 = vmul.f32 %v36, 5.656854
    %38 = vst.msk [vmem:[#allocation4 + $0x3] sm:$0x1] %vm22, %v37
    %s39 = sld [smem:[#allocation3 + $0x4]]
    %s40 = scalar_lea.vmem %s1, %s39
    %v41 = vld [vmem:[%s40] sm:$0x1]
    %v42 = vmul.f32 %v41, 5.656854
    %43 = vst.msk [vmem:[#allocation4 + $0x4] sm:$0x1] %vm22, %v42
    %s44 = sld [smem:[#allocation3 + $0x5]]
    %s45 = scalar_lea.vmem %s1, %s44
    %v46 = vld [vmem:[%s45] sm:$0x1]
    %v47 = vmul.f32 %v46, 5.656854
    %48 = vst.msk [vmem:[#allocation4 + $0x5] sm:$0x1] %vm22, %v47
    %s49 = sld [smem:[#allocation3 + $0x6]]
    %s50 = scalar_lea.vmem %s1, %s49
    %v51 = vld [vmem:[%s50] sm:$0x1]
    %v52 = vmul.f32 %v51, 5.656854
    %53 = vst.msk [vmem:[#allocation4 + $0x6] sm:$0x1] %vm22, %v52
    %s54 = sld [smem:[#allocation3 + $0x7]]
    %s55 = scalar_lea.vmem %s1, %s54
    %v56 = vld [vmem:[%s55] sm:$0x1]
    %v57 = vmul.f32 %v56, 5.656854
    %58 = vst.msk [vmem:[#allocation4 + $0x7] sm:$0x1] %vm22, %v57
    %s59 = sld [smem:[#allocation3 + $0x8]]
    %s60 = scalar_lea.vmem %s1, %s59
    %v61 = vld [vmem:[%s60] sm:$0x1]
    %v62 = vmul.f32 %v61, 5.656854
    %63 = vst.msk [vmem:[#allocation4 + $0x8] sm:$0x1] %vm22, %v62
    %s64 = sld [smem:[#allocation3 + $0x9]]
    %s65 = scalar_lea.vmem %s1, %s64
    %v66 = vld [vmem:[%s65] sm:$0x1]
    %v67 = vmul.f32 %v66, 5.656854
    %68 = vst.msk [vmem:[#allocation4 + $0x9] sm:$0x1] %vm22, %v67
    %s69 = sld [smem:[#allocation3 + $0xa]]
    %s70 = scalar_lea.vmem %s1, %s69
    %v71 = vld [vmem:[%s70] sm:$0x1]
    %v72 = vmul.f32 %v71, 5.656854
    %73 = vst.msk [vmem:[#allocation4 + $0xa] sm:$0x1] %vm22, %v72
    %s74 = sld [smem:[#allocation3 + $0xb]]
    %s75 = scalar_lea.vmem %s1, %s74
    %v76 = vld [vmem:[%s75] sm:$0x1]
    %v77 = vmul.f32 %v76, 5.656854
    %78 = vst.msk [vmem:[#allocation4 + $0xb] sm:$0x1] %vm22, %v77
    %s79 = sld [smem:[#allocation3 + $0xc]]
    %s80 = scalar_lea.vmem %s1, %s79
    %v81 = vld [vmem:[%s80] sm:$0x1]
    %v82 = vmul.f32 %v81, 5.656854
    %83 = vst.msk [vmem:[#allocation4 + $0xc] sm:$0x1] %vm22, %v82
    %s84 = sld [smem:[#allocation3 + $0xd]]
    %s85 = scalar_lea.vmem %s1, %s84
    %v86 = vld [vmem:[%s85] sm:$0x1]
    %v87 = vmul.f32 %v86, 5.656854
    %88 = vst.msk [vmem:[#allocation4 + $0xd] sm:$0x1] %vm22, %v87
    %s89 = sld [smem:[#allocation3 + $0xe]]
    %s90 = scalar_lea.vmem %s1, %s89
    %v91 = vld [vmem:[%s90] sm:$0x1]
    %v92 = vmul.f32 %v91, 5.656854
    %93 = vst.msk [vmem:[#allocation4 + $0xe] sm:$0x1] %vm22, %v92
    %s94 = sld [smem:[#allocation3 + $0xf]]
    %s95 = scalar_lea.vmem %s1, %s94
    %v96 = vld [vmem:[%s95] sm:$0x1]
    %v97 = vmul.f32 %v96, 5.656854
    %98 = vst.msk [vmem:[#allocation4 + $0xf] sm:$0x1] %vm22, %v97
    // Predicated region
    $region6: #{tpu_custom_call.1} parent=1 // pred_check
      _
    $region7: #{tpu_custom_call.1} parent=1 // pred_check_branch
      %100 = sbr.rel (0) target = $region9
    $region8: #{tpu_custom_call.1} parent=1 // pred_region
      %102 = vsyncadd [#allocation5], 0
      %s103 = sshll.u32 [#allocation4], 4
      %s104 = int_to_ptr.vmem [resolvable:$true] %s103
      %s105 = sshll.u32 %s2, 4
      %s106 = int_to_ptr.hbm [resolvable:$true] %s105
      %111 = dma.vmem_to_hbm [thread:$0]  %s104, 256, %s106, [#allocation5], 128, 128, 8
    $region9: #{tpu_custom_call.1} parent=1 // pred_fallthru
      _
    // Predicated region
    $region10: #{tpu_custom_call.1} parent=1 // pred_check
      _
    $region11: #{tpu_custom_call.1} parent=1 // pred_check_branch
      %113 = sbr.rel (0) target = $region13
    $region12: #{tpu_custom_call.1} parent=1 // pred_region
      %115 = dma.done [#allocation5], 256
    $region13: #{tpu_custom_call.1} parent=1 // pred_fallthru
      _
    %116 = vsyncpa [#allocation5], 1

</llo_original>
